<compile_context>
chip_gen: v6e
topology: v6e:2x2x1
jax: 0.10.0
libtpu: 0.0.40
codegen_flags: <defaults>
</compile_context>

<pallas_src>
import math

import jax
import jax.numpy as jnp
from jax.experimental import pallas as pl
from jax.experimental.pallas import tpu as pltpu


def _round_up(n: int, m: int) -> int:
    return ((n + m - 1) // m) * m


def _actor_critic_kernel(x_ref, emb_ref, w1_ref, wh_ref, bh_ref, out_ref):
    # hidden = relu(x @ W1 + (emb + b1)[prev_action])  -- one MXU GEMM, f32 acc
    h = jnp.dot(x_ref[...].astype(jnp.bfloat16), w1_ref[...],
                preferred_element_type=jnp.float32)
    h = jnp.maximum(h + emb_ref[...], 0.0)            # f32 VPU epilogue

    # fused heads: [policy | value | zero-pad] as one lane-dense (TB, 128) GEMM
    out_ref[...] = (
        jnp.dot(h.astype(wh_ref.dtype), wh_ref[...],
                preferred_element_type=jnp.float32)
        + bh_ref[...]
    )


def init_params(key, in_dim, num_actions, hidden):
    """Kernel-ready parameters: fused heads, 128-padded feature dims, bf16 weights."""
    k1, k2, k3, k4 = jax.random.split(key, 4)
    d_pad = _round_up(in_dim, 128)
    h_pad = _round_up(hidden, 128)
    out_pad = _round_up(num_actions + 1, 128)        # [pi(A) | v(1) | zeros]

    s1 = 1.0 / jnp.sqrt(in_dim)
    sh = 1.0 / jnp.sqrt(hidden)
    w1 = jax.random.normal(k1, (in_dim, hidden), jnp.float32) * s1
    w_emb = jax.random.normal(k2, (num_actions, hidden), jnp.float32)
    w_pi = jax.random.normal(k3, (hidden, num_actions), jnp.float32) * sh
    w_v = jax.random.normal(k4, (hidden, 1), jnp.float32) * sh
    b1 = jnp.zeros((hidden,), jnp.float32)

    w1_p = jnp.zeros((d_pad, h_pad), jnp.float32).at[:in_dim, :hidden].set(w1)
    # fold b1 into the embedding table (every row receives b1 exactly once)
    w_emb_p = (jnp.zeros((num_actions, h_pad), jnp.float32)
               .at[:, :hidden].set(w_emb + b1[None, :]))
    w_head = jnp.zeros((h_pad, out_pad), jnp.float32).at[:hidden, :num_actions].set(w_pi)
    w_head = w_head.at[:hidden, num_actions].set(w_v[:, 0])

    return {
        "num_actions": num_actions,
        "in_dim": in_dim,
        "w1": w1_p.astype(jnp.bfloat16),             # (Dp, Hp)  bf16 MXU operand
        "w_emb": w_emb_p,                            # (A, Hp)   f32 (b1 folded in)
        "w_head": w_head.astype(jnp.bfloat16),       # (Hp, 128) fused [pi | v]
        "b_head": jnp.zeros((1, out_pad), jnp.float32),
    }


def actor_critic_forward(x, prev_actions, params):
    """x: (*batch, C, H, W), prev_actions: (*batch,) int
       -> (logits (*batch, A), value (*batch,))."""
    batch_shape = x.shape[:-3]
    c, h, w = x.shape[-3:]
    b = math.prod(batch_shape) if batch_shape else 1
    d = c * h * w

    num_actions = params["num_actions"]
    d_pad, h_pad = params["w1"].shape
    out_pad = params["w_head"].shape[1]

    # --- glue: NCHW row-major flatten (== torch .flatten(1)); pad feature dim
    #     only if needed; keep f32 — the bf16 cast happens inside the kernel.
    x_flat = x.reshape(b, d).astype(jnp.float32)
    if d_pad > d:
        x_flat = jnp.pad(x_flat, ((0, 0), (0, d_pad - d)))

    # previous-action embedding (b1 pre-folded): cheap gather, no one-hot GEMM
    emb = jnp.take(params["w_emb"], prev_actions.reshape(b).astype(jnp.int32), axis=0)

    # batch tiling: multiple of 8 sublanes, 128-row tiles at real batch sizes
    tb = 128 if b >= 128 else _round_up(b, 8)
    b_pad = _round_up(b, tb)
    if b_pad > b:
        x_flat = jnp.pad(x_flat, ((0, b_pad - b), (0, 0)))
        emb = jnp.pad(emb, ((0, b_pad - b), (0, 0)))

    flops = 2 * b_pad * d_pad * h_pad + 2 * b_pad * h_pad * out_pad
    bytes_accessed = (
        x_flat.size * 4 + emb.size * 4
        + params["w1"].size * 2
        + params["w_head"].size * 2 + params["b_head"].size * 4
        + b_pad * out_pad * 4
    )

    out = pl.pallas_call(
        _actor_critic_kernel,
        out_shape=jax.ShapeDtypeStruct((b_pad, out_pad), jnp.float32),
        grid=(b_pad // tb,),
        in_specs=[
            pl.BlockSpec((tb, d_pad), lambda i: (i, 0)),       # x tile (per batch block)
            pl.BlockSpec((tb, h_pad), lambda i: (i, 0)),       # embedding tile
            pl.BlockSpec((d_pad, h_pad), lambda i: (0, 0)),    # W1     (resident)
            pl.BlockSpec((h_pad, out_pad), lambda i: (0, 0)),  # W_head (resident)
            pl.BlockSpec((1, out_pad), lambda i: (0, 0)),      # b_head (resident)
        ],
        out_specs=pl.BlockSpec((tb, out_pad), lambda i: (i, 0)),
        compiler_params=pltpu.CompilerParams(
            dimension_semantics=("parallel",),
        ),
        cost_estimate=pl.CostEstimate(
            flops=flops, transcendentals=0, bytes_accessed=bytes_accessed),
    )(x_flat, emb, params["w1"], params["w_head"], params["b_head"])

    logits = out[:b, :num_actions].reshape(*batch_shape, num_actions)
    value = out[:b, num_actions].reshape(batch_shape)
    return logits, value


def _reference_forward(x, prev_actions, params):
    """Pure-JAX reference at the same (bf16-MXU / f32-acc) precision."""
    batch_shape = x.shape[:-3]
    b = math.prod(batch_shape) if batch_shape else 1
    d = math.prod(x.shape[-3:])
    num_actions = params["num_actions"]
    d_pad = params["w1"].shape[0]

    x_flat = x.reshape(b, d).astype(jnp.float32)
    x_flat = jnp.pad(x_flat, ((0, 0), (0, d_pad - d))).astype(jnp.bfloat16)
    emb = jnp.take(params["w_emb"], prev_actions.reshape(b).astype(jnp.int32), axis=0)

    h = jnp.dot(x_flat, params["w1"], preferred_element_type=jnp.float32)
    h = jnp.maximum(h + emb, 0.0)
    out = jnp.dot(h.astype(jnp.bfloat16), params["w_head"],
                  preferred_element_type=jnp.float32) + params["b_head"]
    return (out[:, :num_actions].reshape(*batch_shape, num_actions),
            out[:, num_actions].reshape(batch_shape))


if __name__ == "__main__":
    # Small shapes consistent with the abstract signature:
    #   x: (*batch, channel, height, width), prev_actions: (*batch,)
    B, C, H, W = 2, 4, 16, 16
    NUM_ACTIONS = 6
    HIDDEN = 128

    key = jax.random.PRNGKey(0)
    kx, ka, kp = jax.random.split(key, 3)

    x = jax.random.normal(kx, (B, C, H, W), jnp.float32)
    # stands in for the int64 prev_actions of the PyTorch spec (JAX default is x32)
    prev_actions = jax.random.randint(ka, (B,), 0, NUM_ACTIONS, dtype=jnp.int32)

    params = init_params(kp, in_dim=C * H * W, num_actions=NUM_ACTIONS, hidden=HIDDEN)

    logits, value = actor_critic_forward(x, prev_actions, params)
    jax.block_until_ready((logits, value))

    assert logits.shape == (B, NUM_ACTIONS)
    assert value.shape == (B,)
    assert bool(jnp.all(jnp.isfinite(logits))) and bool(jnp.all(jnp.isfinite(value)))

    ref_logits, ref_value = _reference_forward(x, prev_actions, params)
    assert jnp.allclose(logits, ref_logits, rtol=5e-2, atol=5e-2)
    assert jnp.allclose(value, ref_value, rtol=5e-2, atol=5e-2)

    print("KERNEL_OK")
</pallas_src>

<mosaic_0001>
module attributes {stable_mosaic.version = 11 : i64} {
  func.func @_actor_critic_kernel(%arg0: i32, %arg1: memref<8x1024xf32, #tpu.memory_space<vmem>>, %arg2: memref<8x128xf32, #tpu.memory_space<vmem>>, %arg3: memref<1024x128xbf16, #tpu.memory_space<vmem>>, %arg4: memref<128x128xbf16, #tpu.memory_space<vmem>>, %arg5: memref<1x128xf32, #tpu.memory_space<vmem>>, %arg6: memref<8x128xf32, #tpu.memory_space<vmem>>) attributes {dimension_semantics = [#tpu.dimension_semantics<parallel>], iteration_bounds = array<i64: 1>, scalar_prefetch = 0 : i64, scratch_operands = 0 : i64, tpu.core_type = #tpu.core_type<tc>, window_params = [{transform_indices = @transform_0, window_bounds = array<i64: 8, 1024>}, {transform_indices = @transform_1, window_bounds = array<i64: 8, 128>}, {pipeline_mode = #tpu.pipeline_mode<synchronous>, transform_indices = @transform_2, window_bounds = array<i64: 1024, 128>}, {pipeline_mode = #tpu.pipeline_mode<synchronous>, transform_indices = @transform_3, window_bounds = array<i64: 128, 128>}, {pipeline_mode = #tpu.pipeline_mode<synchronous>, transform_indices = @transform_4, window_bounds = array<i64: 1, 128>}, {transform_indices = @transform_5, window_bounds = array<i64: 8, 128>}]} {
    %c0 = arith.constant 0 : index
    %c0_0 = arith.constant 0 : index
    %0 = vector.load %arg1[%c0, %c0_0] : memref<8x1024xf32, #tpu.memory_space<vmem>>, vector<8x1024xf32>
    %1 = arith.truncf %0 : vector<8x1024xf32> to vector<8x1024xbf16>
    %c0_1 = arith.constant 0 : index
    %c0_2 = arith.constant 0 : index
    %2 = vector.load %arg3[%c0_1, %c0_2] : memref<1024x128xbf16, #tpu.memory_space<vmem>>, vector<1024x128xbf16>
    %cst = arith.constant dense<0.000000e+00> : vector<8x128xf32>
    %3 = tpu.matmul %1, %2, %cst {dimension_numbers = #tpu.dot_dimension_numbers<[1], [0], [0], [1], [0, 0, 1, 1], [], []>} : vector<8x1024xbf16>, vector<1024x128xbf16>, vector<8x128xf32> -> vector<8x128xf32>
    %c0_3 = arith.constant 0 : index
    %c0_4 = arith.constant 0 : index
    %4 = vector.load %arg2[%c0_3, %c0_4] : memref<8x128xf32, #tpu.memory_space<vmem>>, vector<8x128xf32>
    %5 = arith.addf %3, %4 : vector<8x128xf32>
    %cst_5 = arith.constant 0.000000e+00 : f32
    %6 = vector.broadcast %cst_5 : f32 to vector<8x128xf32>
    %7 = arith.maximumf %5, %6 : vector<8x128xf32>
    %8 = arith.truncf %7 : vector<8x128xf32> to vector<8x128xbf16>
    %c0_6 = arith.constant 0 : index
    %c0_7 = arith.constant 0 : index
    %9 = vector.load %arg4[%c0_6, %c0_7] : memref<128x128xbf16, #tpu.memory_space<vmem>>, vector<128x128xbf16>
    %cst_8 = arith.constant dense<0.000000e+00> : vector<8x128xf32>
    %10 = tpu.matmul %8, %9, %cst_8 {dimension_numbers = #tpu.dot_dimension_numbers<[1], [0], [0], [1], [0, 0, 1, 1], [], []>} : vector<8x128xbf16>, vector<128x128xbf16>, vector<8x128xf32> -> vector<8x128xf32>
    %c0_9 = arith.constant 0 : index
    %c0_10 = arith.constant 0 : index
    %11 = vector.load %arg5[%c0_9, %c0_10] : memref<1x128xf32, #tpu.memory_space<vmem>>, vector<1x128xf32>
    %12 = vector.broadcast %11 : vector<1x128xf32> to vector<8x128xf32>
    %13 = arith.addf %10, %12 : vector<8x128xf32>
    %c0_11 = arith.constant 0 : index
    %c0_12 = arith.constant 0 : index
    %14 = vector.load %arg6[%c0_11, %c0_12] : memref<8x128xf32, #tpu.memory_space<vmem>>, vector<8x128xf32>
    tpu.vector_store %arg6[%c0_11, %c0_12], %13 {strides = array<i32>} : memref<8x128xf32, #tpu.memory_space<vmem>>, vector<8x128xf32>,
    return
  }
  func.func @transform_0(%arg0: i32) -> (i32, i32) {
    %c0_i32 = arith.constant 0 : i32
    %c0_i32_0 = arith.constant 0 : i32
    return %arg0, %c0_i32 : i32, i32
  }
  func.func @transform_1(%arg0: i32) -> (i32, i32) {
    %c0_i32 = arith.constant 0 : i32
    %c0_i32_0 = arith.constant 0 : i32
    return %arg0, %c0_i32 : i32, i32
  }
  func.func @transform_2(%arg0: i32) -> (i32, i32) {
    %c0_i32 = arith.constant 0 : i32
    %c0_i32_0 = arith.constant 0 : i32
    %c0_i32_1 = arith.constant 0 : i32
    return %c0_i32, %c0_i32_0 : i32, i32
  }
  func.func @transform_3(%arg0: i32) -> (i32, i32) {
    %c0_i32 = arith.constant 0 : i32
    %c0_i32_0 = arith.constant 0 : i32
    %c0_i32_1 = arith.constant 0 : i32
    return %c0_i32, %c0_i32_0 : i32, i32
  }
  func.func @transform_4(%arg0: i32) -> (i32, i32) {
    %c0_i32 = arith.constant 0 : i32
    %c0_i32_0 = arith.constant 0 : i32
    %c0_i32_1 = arith.constant 0 : i32
    return %c0_i32, %c0_i32_0 : i32, i32
  }
  func.func @transform_5(%arg0: i32) -> (i32, i32) {
    %c0_i32 = arith.constant 0 : i32
    %c0_i32_0 = arith.constant 0 : i32
    return %arg0, %c0_i32 : i32, i32
  }
}

</mosaic_0001>

<llo_original>
// kernel: tpu_custom_call.1
$region0: #{tpu_custom_call.1}
  #allocation0 [shape = 'u32[]', space=smem, size = 0x4, offset = 0x4, fixed_abs, tag = 'smem constant byte address 0x4 - core index']
  #allocation1 [shape = 'u32[144,128]{1,0:T(1,128)}', space=vmem, size = 0x12000, scoped, tag = 'internal scratch']
  %s0 = inlined_call_operand.hbm [shape: f32[8,1024], index: 0, kind: input, shape index: {}]
  %s1 = inlined_call_operand.hbm [shape: f32[8,128], index: 1, kind: input, shape index: {}]
  %s2 = inlined_call_operand.hbm [shape: bf16[1024,128], index: 2, kind: input, shape index: {}]
  %s3 = inlined_call_operand.hbm [shape: bf16[128,128], index: 3, kind: input, shape index: {}]
  %s4 = inlined_call_operand.vmem [shape: f32[1,128], index: 4, kind: input, shape index: {}]
  %s5 = inlined_call_operand.hbm [shape: f32[8,128], index: 5, kind: output, shape index: {}]
  %s6 = sld [smem:[#allocation0]]
  $region46: #{tpu_custom_call.1} parent=0
    _
  %s8 = ssub.s32 1, %s6
  %s9 = scalar_select 0, %s8, %s6
  $region1: #{tpu_custom_call.1} parent=0
    #allocation2 [shape = 'u8[32768]{0}', space=vmem, size = 0x8000, scoped, tag = 'input window, operand 0, single buffered']
    #allocation3 [shape = 's32[1]{0}', space=sflag, size = 0x4, scoped, tag = 'scoped memory for tpu_custom_call.1']
    #allocation4 [shape = 's32[1]{0}', space=sflag, size = 0x4, scoped, tag = 'scoped memory for tpu_custom_call.1']
    #allocation5 [shape = 'u8[4096]{0}', space=vmem, size = 0x1000, scoped, tag = 'input window, operand 1, single buffered']
    #allocation6 [shape = 's32[1]{0}', space=sflag, size = 0x4, scoped, tag = 'scoped memory for tpu_custom_call.1']
    #allocation7 [shape = 'u8[262144]{0}', space=vmem, size = 0x40000, scoped, tag = 'input window, operand 2, single buffered']
    #allocation8 [shape = 'u8[32768]{0}', space=vmem, size = 0x8000, scoped, tag = 'input window, operand 3, single buffered']
    #allocation9 [shape = 's32[1]{0}', space=sflag, size = 0x4, scoped, tag = 'scoped memory for tpu_custom_call.1']
    #allocation10 [shape = 'u8[4096]{0}', space=vmem, size = 0x1000, scoped, tag = 'output window, operand 0, single buffered']
    %10 = vsyncpa [#allocation3], 0
    %11 = vsyncpa [#allocation6], 0
    %12 = vsyncpa [#allocation9], 0
    %13 = vsyncpa [#allocation4], 0
    // Predicated region
    $region2: #{tpu_custom_call.1} parent=1 // pred_check
      _
    $region3: #{tpu_custom_call.1} parent=1 // pred_check_branch
      %15 = sbr.rel (0) target = $region5
    $region4: #{tpu_custom_call.1} parent=1 // pred_region
      %s17 = ssub.s32 1024, 1024
      %18 = vsyncadd [#allocation3], %s17
      %s20 = sshll.u32 [#allocation2], 4
      %s21 = int_to_ptr.vmem [resolvable:$true] %s20
      %23 = dma.hbm_to_vmem [thread:$0]  %s0, 1024, %s21, [#allocation3]
    $region5: #{tpu_custom_call.1} parent=1 // pred_fallthru
      _
    // Predicated region
    $region6: #{tpu_custom_call.1} parent=1 // pred_check
      _
    $region7: #{tpu_custom_call.1} parent=1 // pred_check_branch
      %25 = sbr.rel (0) target = $region9
    $region8: #{tpu_custom_call.1} parent=1 // pred_region
      %s27 = ssub.s32 128, 128
      %28 = vsyncadd [#allocation6], %s27
      %s30 = sshll.u32 [#allocation5], 4
      %s31 = int_to_ptr.vmem [resolvable:$true] %s30
      %33 = dma.hbm_to_vmem [thread:$0]  %s1, 128, %s31, [#allocation6]
    $region9: #{tpu_custom_call.1} parent=1 // pred_fallthru
      _
    // Predicated region
    $region10: #{tpu_custom_call.1} parent=1 // pred_check
      _
    $region11: #{tpu_custom_call.1} parent=1 // pred_check_branch
      %35 = sbr.rel (0) target = $region13
    $region12: #{tpu_custom_call.1} parent=1 // pred_region
      %s37 = ssub.s32 8192, 8192
      %38 = vsyncadd [#allocation6], %s37
      %s39 = sshll.u32 [#allocation7], 4
      %s40 = int_to_ptr.vmem [resolvable:$true] %s39
      %45 = dma.hbm_to_vmem [thread:$0]  %s2, 8192, %s40, [#allocation6], 64, 64, 4
    $region13: #{tpu_custom_call.1} parent=1 // pred_fallthru
      _
    // Predicated region
    $region14: #{tpu_custom_call.1} parent=1 // pred_check
      _
    $region15: #{tpu_custom_call.1} parent=1 // pred_check_branch
      %47 = sbr.rel (0) target = $region17
    $region16: #{tpu_custom_call.1} parent=1 // pred_region
      %s49 = ssub.s32 1024, 1024
      %50 = vsyncadd [#allocation9], %s49
      %s51 = sshll.u32 [#allocation8], 4
      %s52 = int_to_ptr.vmem [resolvable:$true] %s51
      %57 = dma.hbm_to_vmem [thread:$0]  %s3, 1024, %s52, [#allocation9], 64, 64, 4
    $region17: #{tpu_custom_call.1} parent=1 // pred_fallthru
      _
    // Predicated region
    $region18: #{tpu_custom_call.1} parent=1 // pred_check
      _
    $region19: #{tpu_custom_call.1} parent=1 // pred_check_branch
      %59 = sbr.rel (0) target = $region21
    $region20: #{tpu_custom_call.1} parent=1 // pred_region
      _
    $region21: #{tpu_custom_call.1} parent=1 // pred_fallthru
      _
    // Predicated region
    $region22: #{tpu_custom_call.1} parent=1 // pred_check
      _
    $region23: #{tpu_custom_call.1} parent=1 // pred_check_branch
      %61 = sbr.rel (0) target = $region25
    $region24: #{tpu_custom_call.1} parent=1 // pred_region
      %62 = dma.done [#allocation3], 1024
    $region25: #{tpu_custom_call.1} parent=1 // pred_fallthru
      _
    // Predicated region
    $region26: #{tpu_custom_call.1} parent=1 // pred_check
      _
    $region27: #{tpu_custom_call.1} parent=1 // pred_check_branch
      %64 = sbr.rel (0) target = $region29
    $region28: #{tpu_custom_call.1} parent=1 // pred_region
      %65 = dma.done [#allocation6], 128
    $region29: #{tpu_custom_call.1} parent=1 // pred_fallthru
      _
    // Predicated region
    $region30: #{tpu_custom_call.1} parent=1 // pred_check
      _
    $region31: #{tpu_custom_call.1} parent=1 // pred_check_branch
      %67 = sbr.rel (0) target = $region33
    $region32: #{tpu_custom_call.1} parent=1 // pred_region
      %68 = dma.done [#allocation6], 8192
    $region33: #{tpu_custom_call.1} parent=1 // pred_fallthru
      _
    // Predicated region
    $region34: #{tpu_custom_call.1} parent=1 // pred_check
      _
    $region35: #{tpu_custom_call.1} parent=1 // pred_check_branch
      %70 = sbr.rel (0) target = $region37
    $region36: #{tpu_custom_call.1} parent=1 // pred_region
      %71 = dma.done [#allocation9], 1024
    $region37: #{tpu_custom_call.1} parent=1 // pred_fallthru
      _
    %v73 = vld [vmem:[#allocation2] sm:$0xff]
    %v74 = vld [vmem:[#allocation2 + $0x8] sm:$0xff]
    %v75 = vld [vmem:[#allocation2 + $0x10] sm:$0xff]
    %v76 = vld [vmem:[#allocation2 + $0x18] sm:$0xff]
    %v77 = vld [vmem:[#allocation2 + $0x20] sm:$0xff]
    %v78 = vld [vmem:[#allocation2 + $0x28] sm:$0xff]
    %v79 = vld [vmem:[#allocation2 + $0x30] sm:$0xff]
    %v80 = vld [vmem:[#allocation2 + $0x38] sm:$0xff]
    %v81 = vpack.c.bf16 %v73, %v73
    %v82 = vpack.c.bf16 %v74, %v74
    %v83 = vpack.c.bf16 %v75, %v75
    %v84 = vpack.c.bf16 %v76, %v76
    %v85 = vpack.c.bf16 %v77, %v77
    %v86 = vpack.c.bf16 %v78, %v78
    %v87 = vpack.c.bf16 %v79, %v79
    %v88 = vpack.c.bf16 %v80, %v80
    %v89 = vld [vmem:[#allocation7] sm:$0xf]
    %v90 = vld [vmem:[#allocation7 + $0x4] sm:$0xf]
    %v91 = vld [vmem:[#allocation7 + $0x8] sm:$0xf]
    %v92 = vld [vmem:[#allocation7 + $0xc] sm:$0xf]
    %v93 = vld [vmem:[#allocation7 + $0x10] sm:$0xf]
    %v94 = vld [vmem:[#allocation7 + $0x14] sm:$0xf]
    %v95 = vld [vmem:[#allocation7 + $0x18] sm:$0xf]
    %v96 = vld [vmem:[#allocation7 + $0x1c] sm:$0xf]
    %v97 = vld [vmem:[#allocation7 + $0x20] sm:$0xf]
    %v98 = vld [vmem:[#allocation7 + $0x24] sm:$0xf]
    %v99 = vld [vmem:[#allocation7 + $0x28] sm:$0xf]
    %v100 = vld [vmem:[#allocation7 + $0x2c] sm:$0xf]
    %v101 = vld [vmem:[#allocation7 + $0x30] sm:$0xf]
    %v102 = vld [vmem:[#allocation7 + $0x34] sm:$0xf]
    %v103 = vld [vmem:[#allocation7 + $0x38] sm:$0xf]
    %v104 = vld [vmem:[#allocation7 + $0x3c] sm:$0xf]
    %v105 = vld [vmem:[#allocation7 + $0x40] sm:$0xf]
    %v106 = vld [vmem:[#allocation7 + $0x44] sm:$0xf]
    %v107 = vld [vmem:[#allocation7 + $0x48] sm:$0xf]
    %v108 = vld [vmem:[#allocation7 + $0x4c] sm:$0xf]
    %v109 = vld [vmem:[#allocation7 + $0x50] sm:$0xf]
    %v110 = vld [vmem:[#allocation7 + $0x54] sm:$0xf]
    %v111 = vld [vmem:[#allocation7 + $0x58] sm:$0xf]
    %v112 = vld [vmem:[#allocation7 + $0x5c] sm:$0xf]
    %v113 = vld [vmem:[#allocation7 + $0x60] sm:$0xf]
    %v114 = vld [vmem:[#allocation7 + $0x64] sm:$0xf]
    %v115 = vld [vmem:[#allocation7 + $0x68] sm:$0xf]
    %v116 = vld [vmem:[#allocation7 + $0x6c] sm:$0xf]
    %v117 = vld [vmem:[#allocation7 + $0x70] sm:$0xf]
    %v118 = vld [vmem:[#allocation7 + $0x74] sm:$0xf]
    %v119 = vld [vmem:[#allocation7 + $0x78] sm:$0xf]
    %v120 = vld [vmem:[#allocation7 + $0x7c] sm:$0xf]
    %v121 = vld [vmem:[#allocation7 + $0x80] sm:$0xf]
    %v122 = vld [vmem:[#allocation7 + $0x84] sm:$0xf]
    %v123 = vld [vmem:[#allocation7 + $0x88] sm:$0xf]
    %v124 = vld [vmem:[#allocation7 + $0x8c] sm:$0xf]
    %v125 = vld [vmem:[#allocation7 + $0x90] sm:$0xf]
    %v126 = vld [vmem:[#allocation7 + $0x94] sm:$0xf]
    %v127 = vld [vmem:[#allocation7 + $0x98] sm:$0xf]
    %v128 = vld [vmem:[#allocation7 + $0x9c] sm:$0xf]
    %v129 = vld [vmem:[#allocation7 + $0xa0] sm:$0xf]
    %v130 = vld [vmem:[#allocation7 + $0xa4] sm:$0xf]
    %v131 = vld [vmem:[#allocation7 + $0xa8] sm:$0xf]
    %v132 = vld [vmem:[#allocation7 + $0xac] sm:$0xf]
    %v133 = vld [vmem:[#allocation7 + $0xb0] sm:$0xf]
    %v134 = vld [vmem:[#allocation7 + $0xb4] sm:$0xf]
    %v135 = vld [vmem:[#allocation7 + $0xb8] sm:$0xf]
    %v136 = vld [vmem:[#allocation7 + $0xbc] sm:$0xf]
    %v137 = vld [vmem:[#allocation7 + $0xc0] sm:$0xf]
    %v138 = vld [vmem:[#allocation7 + $0xc4] sm:$0xf]
    %v139 = vld [vmem:[#allocation7 + $0xc8] sm:$0xf]
    %v140 = vld [vmem:[#allocation7 + $0xcc] sm:$0xf]
    %v141 = vld [vmem:[#allocation7 + $0xd0] sm:$0xf]
    %v142 = vld [vmem:[#allocation7 + $0xd4] sm:$0xf]
    %v143 = vld [vmem:[#allocation7 + $0xd8] sm:$0xf]
    %v144 = vld [vmem:[#allocation7 + $0xdc] sm:$0xf]
    %v145 = vld [vmem:[#allocation7 + $0xe0] sm:$0xf]
    %v146 = vld [vmem:[#allocation7 + $0xe4] sm:$0xf]
    %v147 = vld [vmem:[#allocation7 + $0xe8] sm:$0xf]
    %v148 = vld [vmem:[#allocation7 + $0xec] sm:$0xf]
    %v149 = vld [vmem:[#allocation7 + $0xf0] sm:$0xf]
    %v150 = vld [vmem:[#allocation7 + $0xf4] sm:$0xf]
    %v151 = vld [vmem:[#allocation7 + $0xf8] sm:$0xf]
    %v152 = vld [vmem:[#allocation7 + $0xfc] sm:$0xf]
    %v153 = vld [vmem:[#allocation7 + $0x100] sm:$0xf]
    %v154 = vld [vmem:[#allocation7 + $0x104] sm:$0xf]
    %v155 = vld [vmem:[#allocation7 + $0x108] sm:$0xf]
    %v156 = vld [vmem:[#allocation7 + $0x10c] sm:$0xf]
    %v157 = vld [vmem:[#allocation7 + $0x110] sm:$0xf]
    %v158 = vld [vmem:[#allocation7 + $0x114] sm:$0xf]
    %v159 = vld [vmem:[#allocation7 + $0x118] sm:$0xf]
    %v160 = vld [vmem:[#allocation7 + $0x11c] sm:$0xf]
    %v161 = vld [vmem:[#allocation7 + $0x120] sm:$0xf]
    %v162 = vld [vmem:[#allocation7 + $0x124] sm:$0xf]
    %v163 = vld [vmem:[#allocation7 + $0x128] sm:$0xf]
    %v164 = vld [vmem:[#allocation7 + $0x12c] sm:$0xf]
    %v165 = vld [vmem:[#allocation7 + $0x130] sm:$0xf]
    %v166 = vld [vmem:[#allocation7 + $0x134] sm:$0xf]
    %v167 = vld [vmem:[#allocation7 + $0x138] sm:$0xf]
    %v168 = vld [vmem:[#allocation7 + $0x13c] sm:$0xf]
    %v169 = vld [vmem:[#allocation7 + $0x140] sm:$0xf]
    %v170 = vld [vmem:[#allocation7 + $0x144] sm:$0xf]
    %v171 = vld [vmem:[#allocation7 + $0x148] sm:$0xf]
    %v172 = vld [vmem:[#allocation7 + $0x14c] sm:$0xf]
    %v173 = vld [vmem:[#allocation7 + $0x150] sm:$0xf]
    %v174 = vld [vmem:[#allocation7 + $0x154] sm:$0xf]
    %v175 = vld [vmem:[#allocation7 + $0x158] sm:$0xf]
    %v176 = vld [vmem:[#allocation7 + $0x15c] sm:$0xf]
    %v177 = vld [vmem:[#allocation7 + $0x160] sm:$0xf]
    %v178 = vld [vmem:[#allocation7 + $0x164] sm:$0xf]
    %v179 = vld [vmem:[#allocation7 + $0x168] sm:$0xf]
    %v180 = vld [vmem:[#allocation7 + $0x16c] sm:$0xf]
    %v181 = vld [vmem:[#allocation7 + $0x170] sm:$0xf]
    %v182 = vld [vmem:[#allocation7 + $0x174] sm:$0xf]
    %v183 = vld [vmem:[#allocation7 + $0x178] sm:$0xf]
    %v184 = vld [vmem:[#allocation7 + $0x17c] sm:$0xf]
    %v185 = vld [vmem:[#allocation7 + $0x180] sm:$0xf]
    %v186 = vld [vmem:[#allocation7 + $0x184] sm:$0xf]
    %v187 = vld [vmem:[#allocation7 + $0x188] sm:$0xf]
    %v188 = vld [vmem:[#allocation7 + $0x18c] sm:$0xf]
    %v189 = vld [vmem:[#allocation7 + $0x190] sm:$0xf]
    %v190 = vld [vmem:[#allocation7 + $0x194] sm:$0xf]
    %v191 = vld [vmem:[#allocation7 + $0x198] sm:$0xf]
    %v192 = vld [vmem:[#allocation7 + $0x19c] sm:$0xf]
    %v193 = vld [vmem:[#allocation7 + $0x1a0] sm:$0xf]
    %v194 = vld [vmem:[#allocation7 + $0x1a4] sm:$0xf]
    %v195 = vld [vmem:[#allocation7 + $0x1a8] sm:$0xf]
    %v196 = vld [vmem:[#allocation7 + $0x1ac] sm:$0xf]
    %v197 = vld [vmem:[#allocation7 + $0x1b0] sm:$0xf]
    %v198 = vld [vmem:[#allocation7 + $0x1b4] sm:$0xf]
    %v199 = vld [vmem:[#allocation7 + $0x1b8] sm:$0xf]
    %v200 = vld [vmem:[#allocation7 + $0x1bc] sm:$0xf]
    %v201 = vld [vmem:[#allocation7 + $0x1c0] sm:$0xf]
    %v202 = vld [vmem:[#allocation7 + $0x1c4] sm:$0xf]
    %v203 = vld [vmem:[#allocation7 + $0x1c8] sm:$0xf]
    %v204 = vld [vmem:[#allocation7 + $0x1cc] sm:$0xf]
    %v205 = vld [vmem:[#allocation7 + $0x1d0] sm:$0xf]
    %v206 = vld [vmem:[#allocation7 + $0x1d4] sm:$0xf]
    %v207 = vld [vmem:[#allocation7 + $0x1d8] sm:$0xf]
    %v208 = vld [vmem:[#allocation7 + $0x1dc] sm:$0xf]
    %v209 = vld [vmem:[#allocation7 + $0x1e0] sm:$0xf]
    %v210 = vld [vmem:[#allocation7 + $0x1e4] sm:$0xf]
    %v211 = vld [vmem:[#allocation7 + $0x1e8] sm:$0xf]
    %v212 = vld [vmem:[#allocation7 + $0x1ec] sm:$0xf]
    %v213 = vld [vmem:[#allocation7 + $0x1f0] sm:$0xf]
    %v214 = vld [vmem:[#allocation7 + $0x1f4] sm:$0xf]
    %v215 = vld [vmem:[#allocation7 + $0x1f8] sm:$0xf]
    %v216 = vld [vmem:[#allocation7 + $0x1fc] sm:$0xf]
    %v217 = vld [vmem:[#allocation5] sm:$0xff]
    %v346 = vunpack.c.l.b16 %v89
    %v347 = vunpack.c.l.b16 %v90
    %v348 = vunpack.c.l.b16 %v91
    %v349 = vunpack.c.l.b16 %v92
    %v350 = vunpack.c.l.b16 %v93
    %v351 = vunpack.c.l.b16 %v94
    %v352 = vunpack.c.l.b16 %v95
    %v353 = vunpack.c.l.b16 %v96
    %v354 = vunpack.c.l.b16 %v97
    %v355 = vunpack.c.l.b16 %v98
    %v356 = vunpack.c.l.b16 %v99
    %v357 = vunpack.c.l.b16 %v100
    %v358 = vunpack.c.l.b16 %v101
    %v359 = vunpack.c.l.b16 %v102
    %v360 = vunpack.c.l.b16 %v103
    %v361 = vunpack.c.l.b16 %v104
    %v362 = vunpack.c.l.b16 %v105
    %v363 = vunpack.c.l.b16 %v106
    %v364 = vunpack.c.l.b16 %v107
    %v365 = vunpack.c.l.b16 %v108
    %v366 = vunpack.c.l.b16 %v109
    %v367 = vunpack.c.l.b16 %v110
    %v368 = vunpack.c.l.b16 %v111
    %v369 = vunpack.c.l.b16 %v112
    %v370 = vunpack.c.l.b16 %v113
    %v371 = vunpack.c.l.b16 %v114
    %v372 = vunpack.c.l.b16 %v115
    %v373 = vunpack.c.l.b16 %v116
    %v374 = vunpack.c.l.b16 %v117
    %v375 = vunpack.c.l.b16 %v118
    %v376 = vunpack.c.l.b16 %v119
    %v377 = vunpack.c.l.b16 %v120
    %v378 = vunpack.c.l.b16 %v121
    %v379 = vunpack.c.l.b16 %v122
    %v380 = vunpack.c.l.b16 %v123
    %v381 = vunpack.c.l.b16 %v124
    %v382 = vunpack.c.l.b16 %v125
    %v383 = vunpack.c.l.b16 %v126
    %v384 = vunpack.c.l.b16 %v127
    %v385 = vunpack.c.l.b16 %v128
    %v386 = vunpack.c.l.b16 %v129
    %v387 = vunpack.c.l.b16 %v130
    %v388 = vunpack.c.l.b16 %v131
    %v389 = vunpack.c.l.b16 %v132
    %v390 = vunpack.c.l.b16 %v133
    %v391 = vunpack.c.l.b16 %v134
    %v392 = vunpack.c.l.b16 %v135
    %v393 = vunpack.c.l.b16 %v136
    %v394 = vunpack.c.l.b16 %v137
    %v395 = vunpack.c.l.b16 %v138
    %v396 = vunpack.c.l.b16 %v139
    %v397 = vunpack.c.l.b16 %v140
    %v398 = vunpack.c.l.b16 %v141
    %v399 = vunpack.c.l.b16 %v142
    %v400 = vunpack.c.l.b16 %v143
    %v401 = vunpack.c.l.b16 %v144
    %v402 = vunpack.c.l.b16 %v145
    %v403 = vunpack.c.l.b16 %v146
    %v404 = vunpack.c.l.b16 %v147
    %v405 = vunpack.c.l.b16 %v148
    %v406 = vunpack.c.l.b16 %v149
    %v407 = vunpack.c.l.b16 %v150
    %v408 = vunpack.c.l.b16 %v151
    %v409 = vunpack.c.l.b16 %v152
    %v410 = vunpack.c.l.b16 %v153
    %v411 = vunpack.c.l.b16 %v154
    %v412 = vunpack.c.l.b16 %v155
    %v413 = vunpack.c.l.b16 %v156
    %v414 = vunpack.c.l.b16 %v157
    %v415 = vunpack.c.l.b16 %v158
    %v416 = vunpack.c.l.b16 %v159
    %v417 = vunpack.c.l.b16 %v160
    %v418 = vunpack.c.l.b16 %v161
    %v419 = vunpack.c.l.b16 %v162
    %v420 = vunpack.c.l.b16 %v163
    %v421 = vunpack.c.l.b16 %v164
    %v422 = vunpack.c.l.b16 %v165
    %v423 = vunpack.c.l.b16 %v166
    %v424 = vunpack.c.l.b16 %v167
    %v425 = vunpack.c.l.b16 %v168
    %v426 = vunpack.c.l.b16 %v169
    %v427 = vunpack.c.l.b16 %v170
    %v428 = vunpack.c.l.b16 %v171
    %v429 = vunpack.c.l.b16 %v172
    %v430 = vunpack.c.l.b16 %v173
    %v431 = vunpack.c.l.b16 %v174
    %v432 = vunpack.c.l.b16 %v175
    %v433 = vunpack.c.l.b16 %v176
    %v434 = vunpack.c.l.b16 %v177
    %v435 = vunpack.c.l.b16 %v178
    %v436 = vunpack.c.l.b16 %v179
    %v437 = vunpack.c.l.b16 %v180
    %v438 = vunpack.c.l.b16 %v181
    %v439 = vunpack.c.l.b16 %v182
    %v440 = vunpack.c.l.b16 %v183
    %v441 = vunpack.c.l.b16 %v184
    %v442 = vunpack.c.l.b16 %v185
    %v443 = vunpack.c.l.b16 %v186
    %v444 = vunpack.c.l.b16 %v187
    %v445 = vunpack.c.l.b16 %v188
    %v446 = vunpack.c.l.b16 %v189
    %v447 = vunpack.c.l.b16 %v190
    %v448 = vunpack.c.l.b16 %v191
    %v449 = vunpack.c.l.b16 %v192
    %v450 = vunpack.c.l.b16 %v193
    %v451 = vunpack.c.l.b16 %v194
    %v452 = vunpack.c.l.b16 %v195
    %v453 = vunpack.c.l.b16 %v196
    %v454 = vunpack.c.l.b16 %v197
    %v455 = vunpack.c.l.b16 %v198
    %v456 = vunpack.c.l.b16 %v199
    %v457 = vunpack.c.l.b16 %v200
    %v458 = vunpack.c.l.b16 %v201
    %v459 = vunpack.c.l.b16 %v202
    %v460 = vunpack.c.l.b16 %v203
    %v461 = vunpack.c.l.b16 %v204
    %v462 = vunpack.c.l.b16 %v205
    %v463 = vunpack.c.l.b16 %v206
    %v464 = vunpack.c.l.b16 %v207
    %v465 = vunpack.c.l.b16 %v208
    %v466 = vunpack.c.l.b16 %v209
    %v467 = vunpack.c.l.b16 %v210
    %v468 = vunpack.c.l.b16 %v211
    %v469 = vunpack.c.l.b16 %v212
    %v470 = vunpack.c.l.b16 %v213
    %v471 = vunpack.c.l.b16 %v214
    %v472 = vunpack.c.l.b16 %v215
    %v473 = vunpack.c.l.b16 %v216
    %v474 = vpack.c.b16 %v347, %v346
    %v475 = vpack.c.b16 %v349, %v348
    %v476 = vpack.c.b16 %v351, %v350
    %v477 = vpack.c.b16 %v353, %v352
    %v478 = vpack.c.b16 %v355, %v354
    %v479 = vpack.c.b16 %v357, %v356
    %v480 = vpack.c.b16 %v359, %v358
    %v481 = vpack.c.b16 %v361, %v360
    %v482 = vpack.c.b16 %v363, %v362
    %v483 = vpack.c.b16 %v365, %v364
    %v484 = vpack.c.b16 %v367, %v366
    %v485 = vpack.c.b16 %v369, %v368
    %v486 = vpack.c.b16 %v371, %v370
    %v487 = vpack.c.b16 %v373, %v372
    %v488 = vpack.c.b16 %v375, %v374
    %v489 = vpack.c.b16 %v377, %v376
    %v490 = vpack.c.b16 %v379, %v378
    %v491 = vpack.c.b16 %v381, %v380
    %v492 = vpack.c.b16 %v383, %v382
    %v493 = vpack.c.b16 %v385, %v384
    %v494 = vpack.c.b16 %v387, %v386
    %v495 = vpack.c.b16 %v389, %v388
    %v496 = vpack.c.b16 %v391, %v390
    %v497 = vpack.c.b16 %v393, %v392
    %v498 = vpack.c.b16 %v395, %v394
    %v499 = vpack.c.b16 %v397, %v396
    %v500 = vpack.c.b16 %v399, %v398
    %v501 = vpack.c.b16 %v401, %v400
    %v502 = vpack.c.b16 %v403, %v402
    %v503 = vpack.c.b16 %v405, %v404
    %v504 = vpack.c.b16 %v407, %v406
    %v505 = vpack.c.b16 %v409, %v408
    %v506 = vpack.c.b16 %v411, %v410
    %v507 = vpack.c.b16 %v413, %v412
    %v508 = vpack.c.b16 %v415, %v414
    %v509 = vpack.c.b16 %v417, %v416
    %v510 = vpack.c.b16 %v419, %v418
    %v511 = vpack.c.b16 %v421, %v420
    %v512 = vpack.c.b16 %v423, %v422
    %v513 = vpack.c.b16 %v425, %v424
    %v514 = vpack.c.b16 %v427, %v426
    %v515 = vpack.c.b16 %v429, %v428
    %v516 = vpack.c.b16 %v431, %v430
    %v517 = vpack.c.b16 %v433, %v432
    %v518 = vpack.c.b16 %v435, %v434
    %v519 = vpack.c.b16 %v437, %v436
    %v520 = vpack.c.b16 %v439, %v438
    %v521 = vpack.c.b16 %v441, %v440
    %v522 = vpack.c.b16 %v443, %v442
    %v523 = vpack.c.b16 %v445, %v444
    %v524 = vpack.c.b16 %v447, %v446
    %v525 = vpack.c.b16 %v449, %v448
    %v526 = vpack.c.b16 %v451, %v450
    %v527 = vpack.c.b16 %v453, %v452
    %v528 = vpack.c.b16 %v455, %v454
    %v529 = vpack.c.b16 %v457, %v456
    %v530 = vpack.c.b16 %v459, %v458
    %v531 = vpack.c.b16 %v461, %v460
    %v532 = vpack.c.b16 %v463, %v462
    %v533 = vpack.c.b16 %v465, %v464
    %v534 = vpack.c.b16 %v467, %v466
    %v535 = vpack.c.b16 %v469, %v468
    %v536 = vpack.c.b16 %v471, %v470
    %v537 = vpack.c.b16 %v473, %v472
    %602 = vmatprep.subr.bf16.mxu0 0
    %603 = vmatpush1.bf16.msra.mxu0 %v481
    %604 = vmatprep.subr.bf16.mxu0 0
    %605 = vmatpush1.bf16.msra.mxu0 %v480
    %606 = vmatprep.subr.bf16.mxu0 0
    %607 = vmatpush1.bf16.msra.mxu0 %v479
    %608 = vmatprep.subr.bf16.mxu0 0
    %609 = vmatpush1.bf16.msra.mxu0 %v478
    %610 = vmatprep.subr.bf16.mxu0 0
    %611 = vmatpush1.bf16.msra.mxu0 %v477
    %612 = vmatprep.subr.bf16.mxu0 0
    %613 = vmatpush1.bf16.msra.mxu0 %v476
    %614 = vmatprep.subr.bf16.mxu0 0
    %615 = vmatpush1.bf16.msra.mxu0 %v475
    %616 = vmatprep.subr.bf16.mxu0 0
    %617 = vmatpush1.bf16.msra.mxu0 %v474
    %618 = vmatprep.subr.bf16.mxu0 0
    %619 = vmatpush2.bf16.msra.mxu0 %v489
    %620 = vmatprep.subr.bf16.mxu0 0
    %621 = vmatpush2.bf16.msra.mxu0 %v488
    %622 = vmatprep.subr.bf16.mxu0 0
    %623 = vmatpush2.bf16.msra.mxu0 %v487
    %624 = vmatprep.subr.bf16.mxu0 0
    %625 = vmatpush2.bf16.msra.mxu0 %v486
    %626 = vmatprep.subr.bf16.mxu0 0
    %627 = vmatpush2.bf16.msra.mxu0 %v485
    %628 = vmatprep.subr.bf16.mxu0 0
    %629 = vmatpush2.bf16.msra.mxu0 %v484
    %630 = vmatprep.subr.bf16.mxu0 0
    %631 = vmatpush2.bf16.msra.mxu0 %v483
    %632 = vmatprep.subr.bf16.mxu0 0
    %633 = vmatpush2.bf16.msra.mxu0 %v482
    %634 = vmatprep.mubr.bf16.mxu0 %v82
    %635 = vmatmul.mubr.bf16.gmra.mxu0 %v81
    %v636 = vpop.f32.mrf.mxu0
    %v637 = vadd.f32 %v217, %v636
    %v638 = vpop.f32.mrf.mxu0
    %v639 = vpop.f32.mrf.mxu0
    %v640 = vpop.f32.mrf.mxu0
    %641 = vdwg.mxu0
    %642 = vmatprep.subr.bf16.mxu0 0
    %643 = vmatpush1.bf16.msra.mxu0 %v497
    %644 = vmatprep.subr.bf16.mxu0 0
    %645 = vmatpush1.bf16.msra.mxu0 %v496
    %646 = vmatprep.subr.bf16.mxu0 0
    %647 = vmatpush1.bf16.msra.mxu0 %v495
    %648 = vmatprep.subr.bf16.mxu0 0
    %649 = vmatpush1.bf16.msra.mxu0 %v494
    %650 = vmatprep.subr.bf16.mxu0 0
    %651 = vmatpush1.bf16.msra.mxu0 %v493
    %652 = vmatprep.subr.bf16.mxu0 0
    %653 = vmatpush1.bf16.msra.mxu0 %v492
    %654 = vmatprep.subr.bf16.mxu0 0
    %655 = vmatpush1.bf16.msra.mxu0 %v491
    %656 = vmatprep.subr.bf16.mxu0 0
    %657 = vmatpush1.bf16.msra.mxu0 %v490
    %658 = vmatprep.subr.bf16.mxu0 0
    %659 = vmatpush2.bf16.msra.mxu0 %v505
    %660 = vmatprep.subr.bf16.mxu0 0
    %661 = vmatpush2.bf16.msra.mxu0 %v504
    %662 = vmatprep.subr.bf16.mxu0 0
    %663 = vmatpush2.bf16.msra.mxu0 %v503
    %664 = vmatprep.subr.bf16.mxu0 0
    %665 = vmatpush2.bf16.msra.mxu0 %v502
    %666 = vmatprep.subr.bf16.mxu0 0
    %667 = vmatpush2.bf16.msra.mxu0 %v501
    %668 = vmatprep.subr.bf16.mxu0 0
    %669 = vmatpush2.bf16.msra.mxu0 %v500
    %670 = vmatprep.subr.bf16.mxu0 0
    %671 = vmatpush2.bf16.msra.mxu0 %v499
    %672 = vmatprep.subr.bf16.mxu0 0
    %673 = vmatpush2.bf16.msra.mxu0 %v498
    %674 = vmatprep.mubr.bf16.mxu0 %v84
    %675 = vmatmul.mubr.bf16.gmra.mxu0 %v83
    %v676 = vpop.f32.mrf.mxu0
    %v677 = vadd.f32 %v637, %v676
    %v678 = vpop.f32.mrf.mxu0
    %v679 = vpop.f32.mrf.mxu0
    %v680 = vpop.f32.mrf.mxu0
    %681 = vdwg.mxu0
    %682 = vmatprep.subr.bf16.mxu0 0
    %683 = vmatpush1.bf16.msra.mxu0 %v513
    %684 = vmatprep.subr.bf16.mxu0 0
    %685 = vmatpush1.bf16.msra.mxu0 %v512
    %686 = vmatprep.subr.bf16.mxu0 0
    %687 = vmatpush1.bf16.msra.mxu0 %v511
    %688 = vmatprep.subr.bf16.mxu0 0
    %689 = vmatpush1.bf16.msra.mxu0 %v510
    %690 = vmatprep.subr.bf16.mxu0 0
    %691 = vmatpush1.bf16.msra.mxu0 %v509
    %692 = vmatprep.subr.bf16.mxu0 0
    %693 = vmatpush1.bf16.msra.mxu0 %v508
    %694 = vmatprep.subr.bf16.mxu0 0
    %695 = vmatpush1.bf16.msra.mxu0 %v507
    %696 = vmatprep.subr.bf16.mxu0 0
    %697 = vmatpush1.bf16.msra.mxu0 %v506
    %698 = vmatprep.subr.bf16.mxu0 0
    %699 = vmatpush2.bf16.msra.mxu0 %v521
    %700 = vmatprep.subr.bf16.mxu0 0
    %701 = vmatpush2.bf16.msra.mxu0 %v520
    %702 = vmatprep.subr.bf16.mxu0 0
    %703 = vmatpush2.bf16.msra.mxu0 %v519
    %704 = vmatprep.subr.bf16.mxu0 0
    %705 = vmatpush2.bf16.msra.mxu0 %v518
    %706 = vmatprep.subr.bf16.mxu0 0
    %707 = vmatpush2.bf16.msra.mxu0 %v517
    %708 = vmatprep.subr.bf16.mxu0 0
    %709 = vmatpush2.bf16.msra.mxu0 %v516
    %710 = vmatprep.subr.bf16.mxu0 0
    %711 = vmatpush2.bf16.msra.mxu0 %v515
    %712 = vmatprep.subr.bf16.mxu0 0
    %713 = vmatpush2.bf16.msra.mxu0 %v514
    %714 = vmatprep.mubr.bf16.mxu0 %v86
    %715 = vmatmul.mubr.bf16.gmra.mxu0 %v85
    %v716 = vpop.f32.mrf.mxu0
    %v717 = vadd.f32 %v677, %v716
    %v718 = vpop.f32.mrf.mxu0
    %v719 = vpop.f32.mrf.mxu0
    %v720 = vpop.f32.mrf.mxu0
    %721 = vdwg.mxu0
    %722 = vmatprep.subr.bf16.mxu0 0
    %723 = vmatpush1.bf16.msra.mxu0 %v529
    %724 = vmatprep.subr.bf16.mxu0 0
    %725 = vmatpush1.bf16.msra.mxu0 %v528
    %726 = vmatprep.subr.bf16.mxu0 0
    %727 = vmatpush1.bf16.msra.mxu0 %v527
    %728 = vmatprep.subr.bf16.mxu0 0
    %729 = vmatpush1.bf16.msra.mxu0 %v526
    %730 = vmatprep.subr.bf16.mxu0 0
    %731 = vmatpush1.bf16.msra.mxu0 %v525
    %732 = vmatprep.subr.bf16.mxu0 0
    %733 = vmatpush1.bf16.msra.mxu0 %v524
    %734 = vmatprep.subr.bf16.mxu0 0
    %735 = vmatpush1.bf16.msra.mxu0 %v523
    %736 = vmatprep.subr.bf16.mxu0 0
    %737 = vmatpush1.bf16.msra.mxu0 %v522
    %738 = vmatprep.subr.bf16.mxu0 0
    %739 = vmatpush2.bf16.msra.mxu0 %v537
    %740 = vmatprep.subr.bf16.mxu0 0
    %741 = vmatpush2.bf16.msra.mxu0 %v536
    %742 = vmatprep.subr.bf16.mxu0 0
    %743 = vmatpush2.bf16.msra.mxu0 %v535
    %744 = vmatprep.subr.bf16.mxu0 0
    %745 = vmatpush2.bf16.msra.mxu0 %v534
    %746 = vmatprep.subr.bf16.mxu0 0
    %747 = vmatpush2.bf16.msra.mxu0 %v533
    %748 = vmatprep.subr.bf16.mxu0 0
    %749 = vmatpush2.bf16.msra.mxu0 %v532
    %750 = vmatprep.subr.bf16.mxu0 0
    %751 = vmatpush2.bf16.msra.mxu0 %v531
    %752 = vmatprep.subr.bf16.mxu0 0
    %753 = vmatpush2.bf16.msra.mxu0 %v530
    %754 = vmatprep.mubr.bf16.mxu0 %v88
    %755 = vmatmul.mubr.bf16.gmra.mxu0 %v87
    %v756 = vpop.f32.mrf.mxu0
    %v757 = vadd.f32 %v717, %v756
    %v758 = vpop.f32.mrf.mxu0
    %v759 = vpop.f32.mrf.mxu0
    %v760 = vpop.f32.mrf.mxu0
    %761 = vdwg.mxu0
    %v762 = vmax.f32 %v757, 0.0
    %v763 = vpack.c.bf16 %v762, %v762
    %v764 = vld [vmem:[#allocation8] sm:$0xf]
    %v765 = vld [vmem:[#allocation8 + $0x4] sm:$0xf]
    %v766 = vld [vmem:[#allocation8 + $0x8] sm:$0xf]
    %v767 = vld [vmem:[#allocation8 + $0xc] sm:$0xf]
    %v768 = vld [vmem:[#allocation8 + $0x10] sm:$0xf]
    %v769 = vld [vmem:[#allocation8 + $0x14] sm:$0xf]
    %v770 = vld [vmem:[#allocation8 + $0x18] sm:$0xf]
    %v771 = vld [vmem:[#allocation8 + $0x1c] sm:$0xf]
    %v772 = vld [vmem:[#allocation8 + $0x20] sm:$0xf]
    %v773 = vld [vmem:[#allocation8 + $0x24] sm:$0xf]
    %v774 = vld [vmem:[#allocation8 + $0x28] sm:$0xf]
    %v775 = vld [vmem:[#allocation8 + $0x2c] sm:$0xf]
    %v776 = vld [vmem:[#allocation8 + $0x30] sm:$0xf]
    %v777 = vld [vmem:[#allocation8 + $0x34] sm:$0xf]
    %v778 = vld [vmem:[#allocation8 + $0x38] sm:$0xf]
    %v779 = vld [vmem:[#allocation8 + $0x3c] sm:$0xf]
    %v780 = vld [vmem:[%s4] sm:$0x1]
    %v782 = vlaneseq
    %v783 = vshrl.u32 %v782, 7
    %v784 = vsub.s32 0, %v783
    %v785 = vrot.slane %v780, %v784
    %v803 = vunpack.c.l.b16 %v764
    %v804 = vunpack.c.l.b16 %v765
    %v805 = vunpack.c.l.b16 %v766
    %v806 = vunpack.c.l.b16 %v767
    %v807 = vunpack.c.l.b16 %v768
    %v808 = vunpack.c.l.b16 %v769
    %v809 = vunpack.c.l.b16 %v770
    %v810 = vunpack.c.l.b16 %v771
    %v811 = vunpack.c.l.b16 %v772
    %v812 = vunpack.c.l.b16 %v773
    %v813 = vunpack.c.l.b16 %v774
    %v814 = vunpack.c.l.b16 %v775
    %v815 = vunpack.c.l.b16 %v776
    %v816 = vunpack.c.l.b16 %v777
    %v817 = vunpack.c.l.b16 %v778
    %v818 = vunpack.c.l.b16 %v779
    %v819 = vpack.c.b16 %v804, %v803
    %v820 = vpack.c.b16 %v806, %v805
    %v821 = vpack.c.b16 %v808, %v807
    %v822 = vpack.c.b16 %v810, %v809
    %v823 = vpack.c.b16 %v812, %v811
    %v824 = vpack.c.b16 %v814, %v813
    %v825 = vpack.c.b16 %v816, %v815
    %v826 = vpack.c.b16 %v818, %v817
    %835 = vmatprep.subr.bf16.mxu0 0
    %836 = vmatpush1.bf16.msra.mxu0 %v826
    %837 = vmatprep.subr.bf16.mxu0 0
    %838 = vmatpush1.bf16.msra.mxu0 %v825
    %839 = vmatprep.subr.bf16.mxu0 0
    %840 = vmatpush1.bf16.msra.mxu0 %v824
    %841 = vmatprep.subr.bf16.mxu0 0
    %842 = vmatpush1.bf16.msra.mxu0 %v823
    %843 = vmatprep.subr.bf16.mxu0 0
    %844 = vmatpush1.bf16.msra.mxu0 %v822
    %845 = vmatprep.subr.bf16.mxu0 0
    %846 = vmatpush1.bf16.msra.mxu0 %v821
    %847 = vmatprep.subr.bf16.mxu0 0
    %848 = vmatpush1.bf16.msra.mxu0 %v820
    %849 = vmatprep.subr.bf16.mxu0 0
    %850 = vmatpush1.bf16.msra.mxu0 %v819
    %851 = vmatprep.subr.bf16.mxu0 0
    %852 = vmatpush2.bf16.msra.mxu0 0
    %853 = vmatprep.subr.bf16.mxu0 0
    %854 = vmatpush2.bf16.msra.mxu0 0
    %855 = vmatprep.subr.bf16.mxu0 0
    %856 = vmatpush2.bf16.msra.mxu0 0
    %857 = vmatprep.subr.bf16.mxu0 0
    %858 = vmatpush2.bf16.msra.mxu0 0
    %859 = vmatprep.subr.bf16.mxu0 0
    %860 = vmatpush2.bf16.msra.mxu0 0
    %861 = vmatprep.subr.bf16.mxu0 0
    %862 = vmatpush2.bf16.msra.mxu0 0
    %863 = vmatprep.subr.bf16.mxu0 0
    %864 = vmatpush2.bf16.msra.mxu0 0
    %865 = vmatprep.subr.bf16.mxu0 0
    %866 = vmatpush2.bf16.msra.mxu0 0
    %867 = vmatprep.mubr.bf16.mxu0 0
    %868 = vmatmul.mubr.bf16.gmra.mxu0 %v763
    %v869 = vpop.f32.mrf.mxu0
    %v870 = vadd.f32 %v785, %v869
    %v871 = vpop.f32.mrf.mxu0
    %v872 = vpop.f32.mrf.mxu0
    %v873 = vpop.f32.mrf.mxu0
    %874 = vdwg.mxu0
    %875 = vst [vmem:[#allocation10] sm:$0xff] %v870
    // Predicated region
    $region38: #{tpu_custom_call.1} parent=1 // pred_check
      _
    $region39: #{tpu_custom_call.1} parent=1 // pred_check_branch
      %877 = sbr.rel (0) target = $region41
    $region40: #{tpu_custom_call.1} parent=1 // pred_region
      %s879 = ssub.s32 128, 128
      %880 = vsyncadd [#allocation4], %s879
      %s882 = sshll.u32 [#allocation10], 4
      %s883 = int_to_ptr.vmem [resolvable:$true] %s882
      %885 = dma.vmem_to_hbm [thread:$0]  %s883, 128, %s5, [#allocation4]
    $region41: #{tpu_custom_call.1} parent=1 // pred_fallthru
      _
    // Predicated region
    $region42: #{tpu_custom_call.1} parent=1 // pred_check
      _
    $region43: #{tpu_custom_call.1} parent=1 // pred_check_branch
      %887 = sbr.rel (0) target = $region45
    $region44: #{tpu_custom_call.1} parent=1 // pred_region
      %888 = dma.done [#allocation4], 128
    $region45: #{tpu_custom_call.1} parent=1 // pred_fallthru
      _
    %889 = vsyncpa [#allocation3], 1
    %890 = vsyncpa [#allocation6], 1
    %891 = vsyncpa [#allocation9], 1
    %892 = vsyncpa [#allocation4], 1

</llo_original>
